<compile_context>
chip_gen: v7x
topology: tpu7x:2x2x1
jax: 0.10.0
libtpu: 0.0.40
codegen_flags: <defaults>
</compile_context>

<pallas_src>
import functools

import jax
import jax.numpy as jnp
from jax.experimental import pallas as pl
from jax.experimental.pallas import tpu as pltpu

_LANE = 128
_SUBL = 8


def _state_value_kernel(x_ref, coef_ref, b_ref, out_ref, *, obs_dim):
    """x_ref: [D, S_blk, 128] VMEM (batch packed on sublanes x lanes);
    coef_ref: [F] SMEM folded coefficients; b_ref: [1] SMEM bias;
    out_ref: [S_blk, 128] VMEM."""
    acc = jnp.full(out_ref.shape, b_ref[0], dtype=jnp.float32)
    k = 0
    for i in range(obs_dim):
        xi = x_ref[i]                          # [S_blk, 128], fully packed vregs
        inner = coef_ref[k] * xi               # j == i term
        k += 1
        for j in range(i + 1, obs_dim):
            inner = inner + coef_ref[k] * x_ref[j]
            k += 1
        acc = acc + xi * inner                 # Horner: x_i * sum_{j>=i} c_ij x_j
    out_ref[...] = acc.astype(out_ref.dtype)


def state_value(obs, weight, bias, norm_matrix, *, degree=2, add_bias=True):
    """obs: [B, D] f32; weight: flat [D*(D+1)//2] (== nn.Linear weight[0, :]);
    bias: [1]; norm_matrix: [D].  Returns value [B] (matches .squeeze(-1))."""
    if degree != 2:
        raise ValueError("Not set degree properly")   # mirrors the PyTorch module
    B, D = obs.shape
    feat_dim = D * (D + 1) // 2

    w = jnp.asarray(weight, jnp.float32).reshape(feat_dim)
    n = jnp.asarray(norm_matrix, jnp.float32).reshape(D)
    if add_bias:
        b = jnp.asarray(bias, jnp.float32).reshape(1)
    else:
        b = jnp.zeros((1,), jnp.float32)

    # Fold the norm matrix into the linear weights once (plain JAX, length F):
    # coef[k] = w[k] * n[i] * n[j] for the k-th upper-triangular (i, j>=i) pair.
    idx_i, idx_j = [], []
    for i in range(D):
        for j in range(i, D):
            idx_i.append(i)
            idx_j.append(j)
    coef = w * n[jnp.asarray(idx_i)] * n[jnp.asarray(idx_j)]

    # ---- packed [D, S, 128] layout: batch index = row * 128 + lane ----
    rows = pl.cdiv(pl.cdiv(B, _LANE), _SUBL) * _SUBL      # sublane-aligned rows

    # Per-grid-step row block: ~2 MiB of obs per step, multiple of 8 sublanes.
    s_blk = max(_SUBL, ((2 << 20) // (D * _LANE * 4)) // _SUBL * _SUBL)
    s_blk = min(s_blk, rows)
    # v7x has 2 TensorCores: keep >= 2 "parallel" grid blocks when possible.
    if rows > _SUBL and s_blk >= rows:
        s_blk = max(_SUBL, (rows // 2) // _SUBL * _SUBL)

    s_total = pl.cdiv(rows, s_blk) * s_blk                # full grid blocks only
    b_pad = s_total * _LANE

    # Single producer expression: cast + transpose + zero-pad + reshape into
    # the packed layout (padded lanes read zeros; their outputs are sliced off).
    # TODO(synk): have the caller hand obs over already in this layout to drop
    # the transpose pass's extra HBM read+write for very large batches.
    x = jnp.pad(obs.astype(jnp.float32).T, ((0, 0), (0, b_pad - B)))
    x = x.reshape(D, s_total, _LANE)

    grid = (s_total // s_blk,)

    # VMEM budget: double-buffered obs block + out block with headroom for the
    # kernel's VMEM-resident intermediates; capped for v7x's smaller VMEM.
    block_bytes = (D + 1) * s_blk * _LANE * 4
    vmem_limit = int(min(max(6 * block_bytes, 8 << 20), 24 << 20))

    kernel = functools.partial(_state_value_kernel, obs_dim=D)
    out = pl.pallas_call(
        kernel,
        out_shape=jax.ShapeDtypeStruct((s_total, _LANE), jnp.float32),
        grid=grid,
        in_specs=[
            pl.BlockSpec((D, s_blk, _LANE), lambda i: (0, i, 0)),      # obs block
            pl.BlockSpec(memory_space=pltpu.MemorySpace.SMEM),         # coef [F]
            pl.BlockSpec(memory_space=pltpu.MemorySpace.SMEM),         # bias [1]
        ],
        out_specs=pl.BlockSpec((s_blk, _LANE), lambda i: (i, 0)),
        compiler_params=pltpu.CompilerParams(
            dimension_semantics=("parallel",),
            vmem_limit_bytes=vmem_limit),
    )(x, coef, b)

    return out.reshape(b_pad)[:B]                         # [B]


# ----- pure-JAX reference (mirrors the PyTorch code) -----
def _create_features_ref(x, degree=2):
    assert degree == 2
    D = x.shape[1]
    cols = []
    for i in range(D):
        for j in range(i, D):
            cols.append(x[:, i:i + 1] * x[:, j:j + 1])
    return jnp.concatenate(cols, axis=1)


def _state_value_ref(obs, weight, bias, norm_matrix, degree=2, add_bias=True):
    feats = _create_features_ref(obs * norm_matrix[None, :], degree)
    v = feats @ weight.reshape(-1, 1)
    if add_bias:
        v = v + bias.reshape(1, 1)
    return v[:, 0]


def _make_inputs(key, batch, obs_dim):
    feat_dim = obs_dim * (obs_dim + 1) // 2
    k_obs, k_w, k_b, k_n = jax.random.split(key, 4)
    obs = jax.random.normal(k_obs, (batch, obs_dim), dtype=jnp.float32)
    bound = 1.0 / jnp.sqrt(jnp.float32(feat_dim))
    weight = jax.random.uniform(k_w, (feat_dim,), minval=-bound, maxval=bound,
                                dtype=jnp.float32)
    bias = jax.random.uniform(k_b, (1,), minval=-bound, maxval=bound,
                              dtype=jnp.float32)
    norm_matrix = jax.random.uniform(k_n, (obs_dim,), minval=0.5, maxval=1.5,
                                     dtype=jnp.float32)
    return obs, weight, bias, norm_matrix


if __name__ == "__main__":
    key = jax.random.PRNGKey(0)
    k1, k2 = jax.random.split(key)

    # Primary check: module-scale shapes (batch=2, obs_dim=4, degree=2).
    obs, weight, bias, norm_matrix = _make_inputs(k1, batch=2, obs_dim=4)
    value = state_value(obs, weight, bias, norm_matrix, degree=2, add_bias=True)
    value = jax.block_until_ready(value)
    ref = _state_value_ref(obs, weight, bias, norm_matrix, 2, True)
    assert value.shape == (2,), value.shape
    assert jnp.allclose(value, ref, atol=1e-5, rtol=1e-5), (value, ref)

    # Secondary check: odd obs_dim + batch that exercises padding / slicing.
    obs2, w2, b2, n2 = _make_inputs(k2, batch=300, obs_dim=5)
    value2 = jax.block_until_ready(
        state_value(obs2, w2, b2, n2, degree=2, add_bias=True))
    ref2 = _state_value_ref(obs2, w2, b2, n2, 2, True)
    assert value2.shape == (300,), value2.shape
    assert jnp.allclose(value2, ref2, atol=1e-5, rtol=1e-5)

    print("KERNEL_OK")
</pallas_src>

<mosaic_0001>
module attributes {stable_mosaic.version = 11 : i64} {
  func.func @_state_value_kernel(%arg0: i32, %arg1: memref<4x8x128xf32, #tpu.memory_space<vmem>>, %arg2: memref<10xf32, #tpu.memory_space<smem>>, %arg3: memref<1xf32, #tpu.memory_space<smem>>, %arg4: memref<8x128xf32, #tpu.memory_space<vmem>>) attributes {dimension_semantics = [#tpu.dimension_semantics<parallel>], iteration_bounds = array<i64: 1>, scalar_prefetch = 0 : i64, scratch_operands = 0 : i64, tpu.core_type = #tpu.core_type<tc>, window_params = [{transform_indices = @transform_0, window_bounds = array<i64: 4, 8, 128>}, {transform_indices = @transform_1, window_bounds = array<i64: 10>}, {transform_indices = @transform_2, window_bounds = array<i64: 1>}, {transform_indices = @transform_3, window_bounds = array<i64: 8, 128>}]} {
    %c0 = arith.constant 0 : index
    %0 = memref.load %arg3[%c0] : memref<1xf32, #tpu.memory_space<smem>>
    %1 = vector.broadcast %0 : f32 to vector<8x128xf32>
    %c0_0 = arith.constant 0 : index
    %c0_1 = arith.constant 0 : index
    %c0_2 = arith.constant 0 : index
    %2 = vector.load %arg1[%c0_0, %c0_1, %c0_2] : memref<4x8x128xf32, #tpu.memory_space<vmem>>, vector<1x8x128xf32>
    %3 = vector.shape_cast %2 : vector<1x8x128xf32> to vector<8x128xf32>
    %c0_3 = arith.constant 0 : index
    %4 = memref.load %arg2[%c0_3] : memref<10xf32, #tpu.memory_space<smem>>
    %5 = vector.broadcast %4 : f32 to vector<8x128xf32>
    %6 = arith.mulf %5, %3 : vector<8x128xf32>
    %c1 = arith.constant 1 : index
    %7 = memref.load %arg2[%c1] : memref<10xf32, #tpu.memory_space<smem>>
    %c1_4 = arith.constant 1 : index
    %c0_5 = arith.constant 0 : index
    %c0_6 = arith.constant 0 : index
    %8 = vector.load %arg1[%c1_4, %c0_5, %c0_6] : memref<4x8x128xf32, #tpu.memory_space<vmem>>, vector<1x8x128xf32>
    %9 = vector.shape_cast %8 : vector<1x8x128xf32> to vector<8x128xf32>
    %10 = vector.broadcast %7 : f32 to vector<8x128xf32>
    %11 = arith.mulf %10, %9 : vector<8x128xf32>
    %12 = arith.addf %6, %11 : vector<8x128xf32>
    %c2 = arith.constant 2 : index
    %13 = memref.load %arg2[%c2] : memref<10xf32, #tpu.memory_space<smem>>
    %c2_7 = arith.constant 2 : index
    %c0_8 = arith.constant 0 : index
    %c0_9 = arith.constant 0 : index
    %14 = vector.load %arg1[%c2_7, %c0_8, %c0_9] : memref<4x8x128xf32, #tpu.memory_space<vmem>>, vector<1x8x128xf32>
    %15 = vector.shape_cast %14 : vector<1x8x128xf32> to vector<8x128xf32>
    %16 = vector.broadcast %13 : f32 to vector<8x128xf32>
    %17 = arith.mulf %16, %15 : vector<8x128xf32>
    %18 = arith.addf %12, %17 : vector<8x128xf32>
    %c3 = arith.constant 3 : index
    %19 = memref.load %arg2[%c3] : memref<10xf32, #tpu.memory_space<smem>>
    %c3_10 = arith.constant 3 : index
    %c0_11 = arith.constant 0 : index
    %c0_12 = arith.constant 0 : index
    %20 = vector.load %arg1[%c3_10, %c0_11, %c0_12] : memref<4x8x128xf32, #tpu.memory_space<vmem>>, vector<1x8x128xf32>
    %21 = vector.shape_cast %20 : vector<1x8x128xf32> to vector<8x128xf32>
    %22 = vector.broadcast %19 : f32 to vector<8x128xf32>
    %23 = arith.mulf %22, %21 : vector<8x128xf32>
    %24 = arith.addf %18, %23 : vector<8x128xf32>
    %25 = arith.mulf %3, %24 : vector<8x128xf32>
    %26 = arith.addf %1, %25 : vector<8x128xf32>
    %c1_13 = arith.constant 1 : index
    %c0_14 = arith.constant 0 : index
    %c0_15 = arith.constant 0 : index
    %27 = vector.load %arg1[%c1_13, %c0_14, %c0_15] : memref<4x8x128xf32, #tpu.memory_space<vmem>>, vector<1x8x128xf32>
    %28 = vector.shape_cast %27 : vector<1x8x128xf32> to vector<8x128xf32>
    %c4 = arith.constant 4 : index
    %29 = memref.load %arg2[%c4] : memref<10xf32, #tpu.memory_space<smem>>
    %30 = vector.broadcast %29 : f32 to vector<8x128xf32>
    %31 = arith.mulf %30, %28 : vector<8x128xf32>
    %c5 = arith.constant 5 : index
    %32 = memref.load %arg2[%c5] : memref<10xf32, #tpu.memory_space<smem>>
    %c2_16 = arith.constant 2 : index
    %c0_17 = arith.constant 0 : index
    %c0_18 = arith.constant 0 : index
    %33 = vector.load %arg1[%c2_16, %c0_17, %c0_18] : memref<4x8x128xf32, #tpu.memory_space<vmem>>, vector<1x8x128xf32>
    %34 = vector.shape_cast %33 : vector<1x8x128xf32> to vector<8x128xf32>
    %35 = vector.broadcast %32 : f32 to vector<8x128xf32>
    %36 = arith.mulf %35, %34 : vector<8x128xf32>
    %37 = arith.addf %31, %36 : vector<8x128xf32>
    %c6 = arith.constant 6 : index
    %38 = memref.load %arg2[%c6] : memref<10xf32, #tpu.memory_space<smem>>
    %c3_19 = arith.constant 3 : index
    %c0_20 = arith.constant 0 : index
    %c0_21 = arith.constant 0 : index
    %39 = vector.load %arg1[%c3_19, %c0_20, %c0_21] : memref<4x8x128xf32, #tpu.memory_space<vmem>>, vector<1x8x128xf32>
    %40 = vector.shape_cast %39 : vector<1x8x128xf32> to vector<8x128xf32>
    %41 = vector.broadcast %38 : f32 to vector<8x128xf32>
    %42 = arith.mulf %41, %40 : vector<8x128xf32>
    %43 = arith.addf %37, %42 : vector<8x128xf32>
    %44 = arith.mulf %28, %43 : vector<8x128xf32>
    %45 = arith.addf %26, %44 : vector<8x128xf32>
    %c2_22 = arith.constant 2 : index
    %c0_23 = arith.constant 0 : index
    %c0_24 = arith.constant 0 : index
    %46 = vector.load %arg1[%c2_22, %c0_23, %c0_24] : memref<4x8x128xf32, #tpu.memory_space<vmem>>, vector<1x8x128xf32>
    %47 = vector.shape_cast %46 : vector<1x8x128xf32> to vector<8x128xf32>
    %c7 = arith.constant 7 : index
    %48 = memref.load %arg2[%c7] : memref<10xf32, #tpu.memory_space<smem>>
    %49 = vector.broadcast %48 : f32 to vector<8x128xf32>
    %50 = arith.mulf %49, %47 : vector<8x128xf32>
    %c8 = arith.constant 8 : index
    %51 = memref.load %arg2[%c8] : memref<10xf32, #tpu.memory_space<smem>>
    %c3_25 = arith.constant 3 : index
    %c0_26 = arith.constant 0 : index
    %c0_27 = arith.constant 0 : index
    %52 = vector.load %arg1[%c3_25, %c0_26, %c0_27] : memref<4x8x128xf32, #tpu.memory_space<vmem>>, vector<1x8x128xf32>
    %53 = vector.shape_cast %52 : vector<1x8x128xf32> to vector<8x128xf32>
    %54 = vector.broadcast %51 : f32 to vector<8x128xf32>
    %55 = arith.mulf %54, %53 : vector<8x128xf32>
    %56 = arith.addf %50, %55 : vector<8x128xf32>
    %57 = arith.mulf %47, %56 : vector<8x128xf32>
    %58 = arith.addf %45, %57 : vector<8x128xf32>
    %c3_28 = arith.constant 3 : index
    %c0_29 = arith.constant 0 : index
    %c0_30 = arith.constant 0 : index
    %59 = vector.load %arg1[%c3_28, %c0_29, %c0_30] : memref<4x8x128xf32, #tpu.memory_space<vmem>>, vector<1x8x128xf32>
    %60 = vector.shape_cast %59 : vector<1x8x128xf32> to vector<8x128xf32>
    %c9 = arith.constant 9 : index
    %61 = memref.load %arg2[%c9] : memref<10xf32, #tpu.memory_space<smem>>
    %62 = vector.broadcast %61 : f32 to vector<8x128xf32>
    %63 = arith.mulf %62, %60 : vector<8x128xf32>
    %64 = arith.mulf %60, %63 : vector<8x128xf32>
    %65 = arith.addf %58, %64 : vector<8x128xf32>
    %c0_31 = arith.constant 0 : index
    %c0_32 = arith.constant 0 : index
    %66 = vector.load %arg4[%c0_31, %c0_32] : memref<8x128xf32, #tpu.memory_space<vmem>>, vector<8x128xf32>
    tpu.vector_store %arg4[%c0_31, %c0_32], %65 {strides = array<i32>} : memref<8x128xf32, #tpu.memory_space<vmem>>, vector<8x128xf32>,
    return
  }
  func.func @transform_0(%arg0: i32) -> (i32, i32, i32) {
    %c0_i32 = arith.constant 0 : i32
    %c0_i32_0 = arith.constant 0 : i32
    %c0_i32_1 = arith.constant 0 : i32
    return %c0_i32, %arg0, %c0_i32_0 : i32, i32, i32
  }
  func.func @transform_1(%arg0: i32) -> i32 {
    %c0_i32 = arith.constant 0 : i32
    %c0_i32_0 = arith.constant 0 : i32
    return %c0_i32 : i32
  }
  func.func @transform_2(%arg0: i32) -> i32 {
    %c0_i32 = arith.constant 0 : i32
    %c0_i32_0 = arith.constant 0 : i32
    return %c0_i32 : i32
  }
  func.func @transform_3(%arg0: i32) -> (i32, i32) {
    %c0_i32 = arith.constant 0 : i32
    %c0_i32_0 = arith.constant 0 : i32
    return %arg0, %c0_i32 : i32, i32
  }
}

</mosaic_0001>

<llo_original>
// kernel: tpu_custom_call.1
$region0: #{tpu_custom_call.1}
  #allocation0 [shape = 'u32[]', space=smem, size = 0x4, offset = 0x4, fixed_abs, tag = 'smem constant byte address 0x4 - core index']
  #allocation1 [shape = 'u32[144,128]{1,0:T(1,128)}', space=vmem, size = 0x12000, scoped, tag = 'internal scratch']
  #allocation2 [shape = 'f32[1]{0:T(128)S(6)}', space=smem, size = 0x200, scoped, tag = 'scoped memory for tpu_custom_call.1']
  %s0 = inlined_call_operand.hbm [shape: f32[4,8,128], index: 0, kind: input, shape index: {}]
  %s1 = inlined_call_operand.vmem [shape: f32[10], index: 1, kind: input, shape index: {}]
  %s2 = inlined_call_operand.<no memory space> [shape: f32[1], index: 2, kind: input, shape index: {}]
  %s3 = inlined_call_operand.hbm [shape: f32[8,128], index: 3, kind: output, shape index: {}]
  %s4 = sld [smem:[#allocation0]]
  $region30: #{tpu_custom_call.1} parent=0
    _
  %s6 = ssub.s32 1, %s4
  %s7 = scalar_select 0, %s6, %s4
  %8 = sst [smem:[#allocation2]] %s2
  $region1: #{tpu_custom_call.1} parent=0
    #allocation3 [shape = 'u8[16384]{0}', space=vmem, size = 0x4000, scoped, tag = 'input window, operand 0, single buffered']
    #allocation4 [shape = 's32[1]{0}', space=sflag, size = 0x4, scoped, tag = 'scoped memory for tpu_custom_call.1']
    #allocation5 [shape = 's32[1]{0}', space=sflag, size = 0x4, scoped, tag = 'scoped memory for tpu_custom_call.1']
    #allocation6 [shape = 's32[1]{0}', space=sflag, size = 0x4, scoped, tag = 'scoped memory for tpu_custom_call.1']
    #allocation7 [shape = 'u8[512]{0}', space=smem, size = 0x200, scoped, tag = 'input window, operand 1, single buffered']
    #allocation8 [shape = 'u8[4096]{0}', space=vmem, size = 0x1000, scoped, tag = 'output window, operand 0, single buffered']
    %9 = vsyncpa [#allocation4], 0
    %10 = vsyncpa [#allocation6], 0
    %11 = vsyncpa [#allocation5], 0
    // Predicated region
    $region2: #{tpu_custom_call.1} parent=1 // pred_check
      _
    $region3: #{tpu_custom_call.1} parent=1 // pred_check_branch
      %13 = sbr.rel (0) target = $region5
    $region4: #{tpu_custom_call.1} parent=1 // pred_region
      %s15 = ssub.s32 512, 512
      %16 = vsyncadd [#allocation4], %s15
      %s17 = sshll.u32 [#allocation3], 4
      %s18 = int_to_ptr.vmem [resolvable:$true] %s17
      %23 = dma.hbm_to_vmem [thread:$0]  %s0, 512, %s18, [#allocation4], 128, 128, 8
    $region5: #{tpu_custom_call.1} parent=1 // pred_fallthru
      _
    // Predicated region
    $region6: #{tpu_custom_call.1} parent=1 // pred_check
      _
    $region7: #{tpu_custom_call.1} parent=1 // pred_check_branch
      %25 = sbr.rel (0) target = $region9
    $region8: #{tpu_custom_call.1} parent=1 // pred_region
      %s27 = ssub.s32 16, 16
      %28 = vsyncadd [#allocation6], %s27
      %s30 = sshll.u32 %s1, 4
      %s31 = int_to_ptr.vmem [resolvable:$true] %s30
      %33 = dma.vmem_to_smem %s31, 16, [#allocation7], [#allocation6]
    $region9: #{tpu_custom_call.1} parent=1 // pred_fallthru
      _
    // Predicated region
    $region10: #{tpu_custom_call.1} parent=1 // pred_check
      _
    $region11: #{tpu_custom_call.1} parent=1 // pred_check_branch
      %35 = sbr.rel (0) target = $region13
    $region12: #{tpu_custom_call.1} parent=1 // pred_region
      _
    $region13: #{tpu_custom_call.1} parent=1 // pred_fallthru
      _
    // Predicated region
    $region14: #{tpu_custom_call.1} parent=1 // pred_check
      _
    $region15: #{tpu_custom_call.1} parent=1 // pred_check_branch
      %37 = sbr.rel (0) target = $region17
    $region16: #{tpu_custom_call.1} parent=1 // pred_region
      %38 = dma.done [#allocation4], 512
    $region17: #{tpu_custom_call.1} parent=1 // pred_fallthru
      _
    // Predicated region
    $region18: #{tpu_custom_call.1} parent=1 // pred_check
      _
    $region19: #{tpu_custom_call.1} parent=1 // pred_check_branch
      %40 = sbr.rel (0) target = $region21
    $region20: #{tpu_custom_call.1} parent=1 // pred_region
      %41 = dma.done [#allocation6], 16
    $region21: #{tpu_custom_call.1} parent=1 // pred_fallthru
      _
    %42 = sfence
    %s43 = sld [smem:[#allocation2]]
    %v44 = vstv %s43
    %v45 = vld [vmem:[#allocation3] sm:$0xff]
    %s46 = sld [smem:[#allocation7]]
    %v47 = vstv %s46
    %v48 = vmul.f32 %v47, %v45
    %s49 = sld [smem:[#allocation7 + $0x1]]
    %s50 = scalar_lea.vmem [#allocation3], 8
    %v51 = vld [vmem:[%s50] sm:$0xff]
    %v52 = vstv %s49
    %v53 = vmul.f32 %v52, %v51
    %v54 = vadd.f32 %v48, %v53
    %s55 = sld [smem:[#allocation7 + $0x2]]
    %s56 = scalar_lea.vmem [#allocation3], 16
    %v57 = vld [vmem:[%s56] sm:$0xff]
    %v58 = vstv %s55
    %v59 = vmul.f32 %v58, %v57
    %v60 = vadd.f32 %v54, %v59
    %s61 = sld [smem:[#allocation7 + $0x3]]
    %s62 = scalar_lea.vmem [#allocation3], 24
    %v63 = vld [vmem:[%s62] sm:$0xff]
    %v64 = vstv %s61
    %v65 = vmul.f32 %v64, %v63
    %v66 = vadd.f32 %v60, %v65
    %v67 = vmul.f32 %v45, %v66
    %v68 = vadd.f32 %v44, %v67
    %s69 = sld [smem:[#allocation7 + $0x4]]
    %v70 = vstv %s69
    %v71 = vmul.f32 %v70, %v51
    %s72 = sld [smem:[#allocation7 + $0x5]]
    %v73 = vstv %s72
    %v74 = vmul.f32 %v73, %v57
    %v75 = vadd.f32 %v71, %v74
    %s76 = sld [smem:[#allocation7 + $0x6]]
    %v77 = vstv %s76
    %v78 = vmul.f32 %v77, %v63
    %v79 = vadd.f32 %v75, %v78
    %v80 = vmul.f32 %v51, %v79
    %v81 = vadd.f32 %v68, %v80
    %s82 = sld [smem:[#allocation7 + $0x7]]
    %v83 = vstv %s82
    %v84 = vmul.f32 %v83, %v57
    %s85 = sld [smem:[#allocation7 + $0x8]]
    %v86 = vstv %s85
    %v87 = vmul.f32 %v86, %v63
    %v88 = vadd.f32 %v84, %v87
    %v89 = vmul.f32 %v57, %v88
    %v90 = vadd.f32 %v81, %v89
    %s91 = sld [smem:[#allocation7 + $0x9]]
    %v92 = vstv %s91
    %v93 = vmul.f32 %v92, %v63
    %v94 = vmul.f32 %v63, %v93
    %v95 = vadd.f32 %v90, %v94
    %96 = vst [vmem:[#allocation8] sm:$0xff] %v95
    // Predicated region
    $region22: #{tpu_custom_call.1} parent=1 // pred_check
      _
    $region23: #{tpu_custom_call.1} parent=1 // pred_check_branch
      %98 = sbr.rel (0) target = $region25
    $region24: #{tpu_custom_call.1} parent=1 // pred_region
      %s100 = ssub.s32 128, 128
      %101 = vsyncadd [#allocation5], %s100
      %s103 = sshll.u32 [#allocation8], 4
      %s104 = int_to_ptr.vmem [resolvable:$true] %s103
      %106 = dma.vmem_to_hbm [thread:$0]  %s104, 128, %s3, [#allocation5]
    $region25: #{tpu_custom_call.1} parent=1 // pred_fallthru
      _
    // Predicated region
    $region26: #{tpu_custom_call.1} parent=1 // pred_check
      _
    $region27: #{tpu_custom_call.1} parent=1 // pred_check_branch
      %108 = sbr.rel (0) target = $region29
    $region28: #{tpu_custom_call.1} parent=1 // pred_region
      %109 = dma.done [#allocation5], 128
    $region29: #{tpu_custom_call.1} parent=1 // pred_fallthru
      _
    %110 = vsyncpa [#allocation4], 1
    %111 = vsyncpa [#allocation5], 1
    %112 = vsyncpa [#allocation6], 1

</llo_original>
